<compile_context>
chip_gen: v7x
topology: tpu7x:2x2x1
jax: 0.10.0
libtpu: 0.0.40
codegen_flags: <defaults>
</compile_context>

<pallas_src>
import math

import jax
import jax.numpy as jnp
from jax.experimental import pallas as pl
from jax.experimental.pallas import tpu as pltpu


def _locked_dropout_kernel(x_ref, mask_ref, o_ref):
    """Broadcast multiply: activation block * (sequence-shared) mask block."""
    o_ref[...] = x_ref[...] * mask_ref[...]


def _cdiv(a, b):
    return -(-a // b)


def _chip_config():
    """(block_byte_budget, vmem_limit_bytes_or_None, multi_tensorcore) per TPU generation."""
    kind = ""
    try:
        kind = jax.devices()[0].device_kind.lower()
    except Exception:
        pass
    if "v7" in kind:
        # 3.2 TB/s HBM, 64 MiB physical VMEM, 2 TensorCores/chip.
        # 6 MiB blocks * (in + out) * 2 buffers = 24 MiB < 40 MiB scoped limit.
        return 6 << 20, 40 << 20, True
    if "v6" in kind:
        # 1.4 TB/s HBM, 128 MiB physical VMEM.
        return 4 << 20, 64 << 20, False
    if ("v5p" in kind or "v4" in kind) and "lite" not in kind:
        # Megacore chips with 128 MiB VMEM.
        return 4 << 20, 64 << 20, True
    # v5e & older / unknown: stay inside the 16 MiB default scoped VMEM.
    return 2 << 20, None, False


def _row_unit(dtype):
    """Sublane tile granularity: 8 rows x sub-32-bit packing (8 f32, 16 bf16, 32 int8/fp8)."""
    return 8 * max(1, 4 // jnp.dtype(dtype).itemsize)


def _even_steps_tile(total, tile, unit):
    """Shrink `tile` (kept a multiple of `unit`) so the grid axis has an even number
    (>=2) of roughly equal steps — balances work across v7x's two TensorCores."""
    if total <= unit:
        return min(tile, total)
    n = _cdiv(total, tile)
    if n < 2:
        n = 2
    if n % 2:
        n += 1
    t = _cdiv(_cdiv(total, n), unit) * unit
    return max(unit, min(t, total))


def _tile_rows(total_rows, row_bytes, budget, unit):
    """Sublane tile size: multiple of `unit` (or full extent), ~budget bytes per block."""
    if total_rows * row_bytes <= budget or total_rows <= unit:
        return int(total_rows)
    rows = (budget // max(1, row_bytes)) // unit * unit
    return int(max(unit, min(rows, total_rows)))


def _make_mask(key, keep_prob, batch, hidden, dtype):
    """(batch, hidden) mask of 0 or 1/keep_prob values, in the activation dtype."""
    keep = jax.random.bernoulli(key, keep_prob, (batch, hidden))
    return keep.astype(dtype) * jnp.asarray(1.0 / keep_prob, dtype)


def _cparams(n_axes, vmem_limit):
    return pltpu.CompilerParams(
        dimension_semantics=("parallel",) * n_axes,
        vmem_limit_bytes=vmem_limit)


def rnn_dropout(x, key, p, *, batch_first=False, training=True,
                block_bytes=None, min_pallas_bytes=256 * 1024):
    """JAX/Pallas equivalent of RNNDropout.forward (variational / locked dropout)."""
    if not training or p == 0.0:
        return x
    p = float(p)
    if p >= 1.0:
        # NOTE: PyTorch's mask/(1-p) is NaN/Inf in this degenerate case; we return zeros.
        return jnp.zeros_like(x)
    keep_prob = 1.0 - p
    assert x.ndim == 3, "RNNDropout expects a rank-3 activation tensor"

    budget, vmem_limit, multi_core = _chip_config()
    if block_bytes is not None:
        budget = int(block_bytes)

    itemsize = jnp.dtype(x.dtype).itemsize
    unit = _row_unit(x.dtype)

    if batch_first:
        B, S, H = x.shape
    else:
        S, B, H = x.shape
    mask = _make_mask(key, keep_prob, B, H, x.dtype)                  # (B, H)

    # Tiny activations: per-step + launch overhead dominates -> plain fused jnp.
    if x.size * itemsize <= min_pallas_bytes:
        m = mask[:, None, :] if batch_first else mask[None, :, :]
        return x * m

    if not batch_first:
        # (S, B, H): collapse (B, H) -> BH (contiguous, free) so blocks are sublane- and
        # lane-dense (unmasked vector stores). Mask row is shared by every seq block.
        BH = B * H
        x2 = x.reshape(S, BH)
        mask2 = mask.reshape(1, BH)
        row_bytes = BH * itemsize

        if unit * row_bytes > budget:
            # Very wide rows: tile the lane axis too (multiples of 128) so
            # double-buffering never exceeds scoped / physical VMEM.
            lane = max(128, (budget // (unit * itemsize)) // 128 * 128)
            lane = min(lane, BH)
            ts = max(unit, (budget // (lane * itemsize)) // unit * unit)
            if ts >= S:
                ts = S
            grid = (_cdiv(S, ts), _cdiv(BH, lane))
            out2 = pl.pallas_call(
                _locked_dropout_kernel,
                out_shape=jax.ShapeDtypeStruct((S, BH), x.dtype),
                grid=grid,
                in_specs=[pl.BlockSpec((ts, lane), lambda i, j: (i, j)),
                          pl.BlockSpec((1, lane), lambda i, j: (0, j))],
                out_specs=pl.BlockSpec((ts, lane), lambda i, j: (i, j)),
                compiler_params=_cparams(2, vmem_limit),
            )(x2, mask2)
            return out2.reshape(S, B, H)

        ts = _tile_rows(S, row_bytes, budget, unit)
        if multi_core:
            ts = _even_steps_tile(S, ts, unit)
        grid = (_cdiv(S, ts),)
        out2 = pl.pallas_call(
            _locked_dropout_kernel,
            out_shape=jax.ShapeDtypeStruct((S, BH), x.dtype),
            grid=grid,
            in_specs=[pl.BlockSpec((ts, BH), lambda i: (i, 0)),
                      pl.BlockSpec((1, BH), lambda i: (0, 0))],
            out_specs=pl.BlockSpec((ts, BH), lambda i: (i, 0)),
            compiler_params=_cparams(1, vmem_limit),
        )(x2, mask2)
        return out2.reshape(S, B, H)

    # ----- batch_first=True: x is (B, S, H); mask shared over the middle (seq) axis -----
    g = 128 // math.gcd(H, 128)            # min seq steps per lane block so width % 128 == 0
    lane_unit = g * H                      # = lcm(H, 128), a multiple of both H and 128

    if H % 128 != 0 and lane_unit <= 2048 and S >= 2 * g:
        # Narrow / misaligned H (e.g. 32, 96): collapse to (B, S*H) and pass a lane-tiled
        # mask so every store is a full, unmasked 128-lane vreg (big lane-density win).
        budget_c = max(128 * 1024, (budget * 2) // 3)   # mask block is block-sized here
        x2 = x.reshape(B, S * H)
        k_cap = max(1, S // (8 * g))                    # keep mask replication <= ~S/8
        k_budget = max(1, budget_c // (min(B, unit) * lane_unit * itemsize))
        k = max(1, min(k_budget, k_cap))
        lb = k * lane_unit
        if multi_core:
            lb = _even_steps_tile(S * H, lb, lane_unit)
        tb = budget_c // (lb * itemsize)
        if tb >= B or B <= 8:
            tb = B
        else:
            tb = max(8, (tb // 8) * 8)
        mask2 = jnp.tile(mask, (1, lb // H))            # (B, lb), repeats with period H
        grid = (_cdiv(B, tb), _cdiv(S * H, lb))
        out2 = pl.pallas_call(
            _locked_dropout_kernel,
            out_shape=jax.ShapeDtypeStruct((B, S * H), x.dtype),
            grid=grid,
            in_specs=[pl.BlockSpec((tb, lb), lambda b, j: (b, j)),
                      pl.BlockSpec((tb, lb), lambda b, j: (b, 0))],
            out_specs=pl.BlockSpec((tb, lb), lambda b, j: (b, j)),
            compiler_params=_cparams(2, vmem_limit),
        )(x2, mask2)
        return out2.reshape(B, S, H)

    # H is a multiple of 128 (or too wide to collapse cheaply): keep the native (B, S, H)
    # layout with (TB, TS, H) blocks; the (TB, 1, H) mask block broadcasts over TS.
    ts = _tile_rows(S, H * itemsize, budget, unit)
    if multi_core:
        ts = _even_steps_tile(S, ts, unit)
    tb = int(min(B, max(1, budget // max(1, ts * H * itemsize))))
    mask3 = mask[:, None, :]                            # (B, 1, H)
    grid = (_cdiv(B, tb), _cdiv(S, ts))
    return pl.pallas_call(
        _locked_dropout_kernel,
        out_shape=jax.ShapeDtypeStruct((B, S, H), x.dtype),
        grid=grid,
        in_specs=[pl.BlockSpec((tb, ts, H), lambda b, s: (b, s, 0)),
                  pl.BlockSpec((tb, 1, H), lambda b, s: (b, 0, 0))],
        out_specs=pl.BlockSpec((tb, ts, H), lambda b, s: (b, s, 0)),
        compiler_params=_cparams(2, vmem_limit),
    )(x, mask3)


if __name__ == "__main__":
    key = jax.random.PRNGKey(0)
    kx, kmask, kx2 = jax.random.split(key, 3)
    p = 0.25
    keep_prob = 1.0 - p

    # Tiling-helper sanity (pure Python; covers the v7x two-TC balancing path too).
    assert _even_steps_tile(128, 128, 8) == 64
    assert _even_steps_tile(8, 8, 8) == 8
    assert _even_steps_tile(20, 20, 8) == 16

    # --- batch_first=False Pallas path: (S, B, H) collapsed to (S, B*H) ---------------
    S, B, H = 128, 8, 96                          # 384 KiB f32 -> routes through Pallas
    x = jax.random.normal(kx, (S, B, H), dtype=jnp.float32)
    mask_bh = _make_mask(kmask, keep_prob, B, H, jnp.float32)          # (B, H)

    out = jax.block_until_ready(rnn_dropout(x, kmask, p, batch_first=False, training=True))
    assert out.shape == x.shape and out.dtype == x.dtype
    expected = x * mask_bh[None, :, :]
    assert bool(jnp.allclose(out, expected, atol=1e-6)), "batch_first=False mismatch"

    # --- wide-row guard path (lane-tiled 2-D grid), forced via a tiny block budget ----
    out_guard = jax.block_until_ready(
        rnn_dropout(x, kmask, p, batch_first=False, training=True, block_bytes=16 * 1024))
    assert bool(jnp.allclose(out_guard, expected, atol=1e-6)), "lane-tiled guard mismatch"

    # --- batch_first=True, H=96 (<128): lane-collapse path with tiled mask ------------
    xb = jnp.transpose(x, (1, 0, 2))                                    # (B, S, H)
    outb = jax.block_until_ready(rnn_dropout(xb, kmask, p, batch_first=True, training=True))
    expected_b = xb * mask_bh[:, None, :]
    assert bool(jnp.allclose(outb, expected_b, atol=1e-6)), "batch_first=True (collapse) mismatch"

    # --- batch_first=True, H=128 (lane-aligned): native 3-D block path ----------------
    B2, S2, H2 = 8, 128, 128
    x3 = jax.random.normal(kx2, (B2, S2, H2), dtype=jnp.float32)
    mask2_bh = _make_mask(kmask, keep_prob, B2, H2, jnp.float32)
    out3 = jax.block_until_ready(rnn_dropout(x3, kmask, p, batch_first=True, training=True))
    assert bool(jnp.allclose(out3, x3 * mask2_bh[:, None, :], atol=1e-6)), "3-D path mismatch"

    # --- small-tensor fast path (jnp, no pallas_call) ----------------------------------
    xs = jax.random.normal(kx, (8, 4, 32), dtype=jnp.float32)           # 4 KiB
    mask_s = _make_mask(kmask, keep_prob, 4, 32, jnp.float32)
    outs = jax.block_until_ready(rnn_dropout(xs, kmask, p, batch_first=False, training=True))
    assert bool(jnp.allclose(outs, xs * mask_s[None, :, :], atol=1e-6)), "fast path mismatch"

    # --- eval mode is the identity; p=1 zeroes everything -------------------------------
    assert bool(jnp.all(rnn_dropout(x, kmask, p, training=False) == x))
    assert bool(jnp.all(rnn_dropout(x, kmask, 1.0, training=True) == 0))

    print("KERNEL_OK")
</pallas_src>

<mosaic_0001>
module attributes {stable_mosaic.version = 11 : i64} {
  func.func @_locked_dropout_kernel(%arg0: i32, %arg1: memref<128x768xf32, #tpu.memory_space<vmem>>, %arg2: memref<1x768xf32, #tpu.memory_space<vmem>>, %arg3: memref<128x768xf32, #tpu.memory_space<vmem>>) attributes {dimension_semantics = [#tpu.dimension_semantics<parallel>], iteration_bounds = array<i64: 1>, scalar_prefetch = 0 : i64, scratch_operands = 0 : i64, tpu.core_type = #tpu.core_type<tc>, window_params = [{transform_indices = @transform_0, window_bounds = array<i64: 128, 768>}, {pipeline_mode = #tpu.pipeline_mode<synchronous>, transform_indices = @transform_1, window_bounds = array<i64: 1, 768>}, {transform_indices = @transform_2, window_bounds = array<i64: 128, 768>}]} {
    %c0 = arith.constant 0 : index
    %c0_0 = arith.constant 0 : index
    %0 = vector.load %arg1[%c0, %c0_0] : memref<128x768xf32, #tpu.memory_space<vmem>>, vector<128x768xf32>
    %c0_1 = arith.constant 0 : index
    %c0_2 = arith.constant 0 : index
    %1 = vector.load %arg2[%c0_1, %c0_2] : memref<1x768xf32, #tpu.memory_space<vmem>>, vector<1x768xf32>
    %2 = vector.broadcast %1 : vector<1x768xf32> to vector<128x768xf32>
    %3 = arith.mulf %0, %2 : vector<128x768xf32>
    %c0_3 = arith.constant 0 : index
    %c0_4 = arith.constant 0 : index
    %4 = vector.load %arg3[%c0_3, %c0_4] : memref<128x768xf32, #tpu.memory_space<vmem>>, vector<128x768xf32>
    tpu.vector_store %arg3[%c0_3, %c0_4], %3 {strides = array<i32>} : memref<128x768xf32, #tpu.memory_space<vmem>>, vector<128x768xf32>,
    return
  }
  func.func @transform_0(%arg0: i32) -> (i32, i32) {
    %c0_i32 = arith.constant 0 : i32
    %c0_i32_0 = arith.constant 0 : i32
    return %arg0, %c0_i32 : i32, i32
  }
  func.func @transform_1(%arg0: i32) -> (i32, i32) {
    %c0_i32 = arith.constant 0 : i32
    %c0_i32_0 = arith.constant 0 : i32
    %c0_i32_1 = arith.constant 0 : i32
    return %c0_i32, %c0_i32_0 : i32, i32
  }
  func.func @transform_2(%arg0: i32) -> (i32, i32) {
    %c0_i32 = arith.constant 0 : i32
    %c0_i32_0 = arith.constant 0 : i32
    return %arg0, %c0_i32 : i32, i32
  }
}

</mosaic_0001>

<llo_original>
// kernel: tpu_custom_call.1
$region0: #{tpu_custom_call.1}
  #allocation0 [shape = 'u32[]', space=smem, size = 0x4, offset = 0x4, fixed_abs, tag = 'smem constant byte address 0x4 - core index']
  #allocation1 [shape = 'u32[144,128]{1,0:T(1,128)}', space=vmem, size = 0x12000, scoped, tag = 'internal scratch']
  %s0 = inlined_call_operand.hbm [shape: f32[128,768], index: 0, kind: input, shape index: {}]
  %s1 = inlined_call_operand.hbm [shape: f32[1,768], index: 1, kind: input, shape index: {}]
  %s2 = inlined_call_operand.hbm [shape: f32[128,768], index: 2, kind: output, shape index: {}]
  %s3 = sld [smem:[#allocation0]]
  $region26: #{tpu_custom_call.1} parent=0
    _
  %s5 = ssub.s32 1, %s3
  %s6 = scalar_select 0, %s5, %s3
  $region1: #{tpu_custom_call.1} parent=0
    #allocation2 [shape = 'u8[393216]{0}', space=vmem, size = 0x60000, scoped, tag = 'input window, operand 0, single buffered']
    #allocation3 [shape = 's32[1]{0}', space=sflag, size = 0x4, scoped, tag = 'scoped memory for tpu_custom_call.1']
    #allocation4 [shape = 's32[1]{0}', space=sflag, size = 0x4, scoped, tag = 'scoped memory for tpu_custom_call.1']
    #allocation5 [shape = 'u8[3072]{0}', space=vmem, size = 0xc00, scoped, tag = 'input window, operand 1, single buffered']
    #allocation6 [shape = 's32[1]{0}', space=sflag, size = 0x4, scoped, tag = 'scoped memory for tpu_custom_call.1']
    #allocation7 [shape = 'u8[393216]{0}', space=vmem, size = 0x60000, scoped, tag = 'output window, operand 0, single buffered']
    %7 = vsyncpa [#allocation3], 0
    %8 = vsyncpa [#allocation6], 0
    %9 = vsyncpa [#allocation4], 0
    // Predicated region
    $region2: #{tpu_custom_call.1} parent=1 // pred_check
      _
    $region3: #{tpu_custom_call.1} parent=1 // pred_check_branch
      %11 = sbr.rel (0) target = $region5
    $region4: #{tpu_custom_call.1} parent=1 // pred_region
      %s13 = ssub.s32 12288, 12288
      %14 = vsyncadd [#allocation3], %s13
      %s15 = sshll.u32 [#allocation2], 4
      %s16 = int_to_ptr.vmem [resolvable:$true] %s15
      %21 = dma.hbm_to_vmem [thread:$0]  %s0, 12288, %s16, [#allocation3], 768, 768, 48
    $region5: #{tpu_custom_call.1} parent=1 // pred_fallthru
      _
    // Predicated region
    $region6: #{tpu_custom_call.1} parent=1 // pred_check
      _
    $region7: #{tpu_custom_call.1} parent=1 // pred_check_branch
      %23 = sbr.rel (0) target = $region9
    $region8: #{tpu_custom_call.1} parent=1 // pred_region
      %s25 = ssub.s32 96, 96
      %26 = vsyncadd [#allocation6], %s25
      %s28 = sshll.u32 [#allocation5], 4
      %s29 = int_to_ptr.vmem [resolvable:$true] %s28
      %31 = dma.hbm_to_vmem [thread:$0]  %s1, 96, %s29, [#allocation6]
    $region9: #{tpu_custom_call.1} parent=1 // pred_fallthru
      _
    // Predicated region
    $region10: #{tpu_custom_call.1} parent=1 // pred_check
      _
    $region11: #{tpu_custom_call.1} parent=1 // pred_check_branch
      %33 = sbr.rel (0) target = $region13
    $region12: #{tpu_custom_call.1} parent=1 // pred_region
      %34 = dma.done [#allocation3], 12288
    $region13: #{tpu_custom_call.1} parent=1 // pred_fallthru
      _
    // Predicated region
    $region14: #{tpu_custom_call.1} parent=1 // pred_check
      _
    $region15: #{tpu_custom_call.1} parent=1 // pred_check_branch
      %36 = sbr.rel (0) target = $region17
    $region16: #{tpu_custom_call.1} parent=1 // pred_region
      %37 = dma.done [#allocation6], 96
    $region17: #{tpu_custom_call.1} parent=1 // pred_fallthru
      _
    %v38 = vld [vmem:[#allocation2] sm:$0xff]
    %v39 = vld [vmem:[#allocation2 + $0x8] sm:$0xff]
    %v40 = vld [vmem:[#allocation2 + $0x10] sm:$0xff]
    %v41 = vld [vmem:[#allocation2 + $0x18] sm:$0xff]
    %v42 = vld [vmem:[#allocation2 + $0x20] sm:$0xff]
    %v43 = vld [vmem:[#allocation2 + $0x28] sm:$0xff]
    %v44 = vld [vmem:[#allocation2 + $0x30] sm:$0xff]
    %v45 = vld [vmem:[#allocation2 + $0x38] sm:$0xff]
    %v46 = vld [vmem:[#allocation2 + $0x40] sm:$0xff]
    %v47 = vld [vmem:[#allocation2 + $0x48] sm:$0xff]
    %v48 = vld [vmem:[#allocation2 + $0x50] sm:$0xff]
    %v49 = vld [vmem:[#allocation2 + $0x58] sm:$0xff]
    %v50 = vld [vmem:[#allocation2 + $0x60] sm:$0xff]
    %v51 = vld [vmem:[#allocation2 + $0x68] sm:$0xff]
    %v52 = vld [vmem:[#allocation2 + $0x70] sm:$0xff]
    %v53 = vld [vmem:[#allocation2 + $0x78] sm:$0xff]
    %v54 = vld [vmem:[#allocation2 + $0x80] sm:$0xff]
    %v55 = vld [vmem:[#allocation2 + $0x88] sm:$0xff]
    %v56 = vld [vmem:[#allocation2 + $0x90] sm:$0xff]
    %v57 = vld [vmem:[#allocation2 + $0x98] sm:$0xff]
    %v58 = vld [vmem:[#allocation2 + $0xa0] sm:$0xff]
    %v59 = vld [vmem:[#allocation2 + $0xa8] sm:$0xff]
    %v60 = vld [vmem:[#allocation2 + $0xb0] sm:$0xff]
    %v61 = vld [vmem:[#allocation2 + $0xb8] sm:$0xff]
    %v62 = vld [vmem:[#allocation2 + $0xc0] sm:$0xff]
    %v63 = vld [vmem:[#allocation2 + $0xc8] sm:$0xff]
    %v64 = vld [vmem:[#allocation2 + $0xd0] sm:$0xff]
    %v65 = vld [vmem:[#allocation2 + $0xd8] sm:$0xff]
    %v66 = vld [vmem:[#allocation2 + $0xe0] sm:$0xff]
    %v67 = vld [vmem:[#allocation2 + $0xe8] sm:$0xff]
    %v68 = vld [vmem:[#allocation2 + $0xf0] sm:$0xff]
    %v69 = vld [vmem:[#allocation2 + $0xf8] sm:$0xff]
    %v70 = vld [vmem:[#allocation2 + $0x100] sm:$0xff]
    %v71 = vld [vmem:[#allocation2 + $0x108] sm:$0xff]
    %v72 = vld [vmem:[#allocation2 + $0x110] sm:$0xff]
    %v73 = vld [vmem:[#allocation2 + $0x118] sm:$0xff]
    %v74 = vld [vmem:[#allocation2 + $0x120] sm:$0xff]
    %v75 = vld [vmem:[#allocation2 + $0x128] sm:$0xff]
    %v76 = vld [vmem:[#allocation2 + $0x130] sm:$0xff]
    %v77 = vld [vmem:[#allocation2 + $0x138] sm:$0xff]
    %v78 = vld [vmem:[#allocation2 + $0x140] sm:$0xff]
    %v79 = vld [vmem:[#allocation2 + $0x148] sm:$0xff]
    %v80 = vld [vmem:[#allocation2 + $0x150] sm:$0xff]
    %v81 = vld [vmem:[#allocation2 + $0x158] sm:$0xff]
    %v82 = vld [vmem:[#allocation2 + $0x160] sm:$0xff]
    %v83 = vld [vmem:[#allocation2 + $0x168] sm:$0xff]
    %v84 = vld [vmem:[#allocation2 + $0x170] sm:$0xff]
    %v85 = vld [vmem:[#allocation2 + $0x178] sm:$0xff]
    %v86 = vld [vmem:[#allocation2 + $0x180] sm:$0xff]
    %v87 = vld [vmem:[#allocation2 + $0x188] sm:$0xff]
    %v88 = vld [vmem:[#allocation2 + $0x190] sm:$0xff]
    %v89 = vld [vmem:[#allocation2 + $0x198] sm:$0xff]
    %v90 = vld [vmem:[#allocation2 + $0x1a0] sm:$0xff]
    %v91 = vld [vmem:[#allocation2 + $0x1a8] sm:$0xff]
    %v92 = vld [vmem:[#allocation2 + $0x1b0] sm:$0xff]
    %v93 = vld [vmem:[#allocation2 + $0x1b8] sm:$0xff]
    %v94 = vld [vmem:[#allocation2 + $0x1c0] sm:$0xff]
    %v95 = vld [vmem:[#allocation2 + $0x1c8] sm:$0xff]
    %v96 = vld [vmem:[#allocation2 + $0x1d0] sm:$0xff]
    %v97 = vld [vmem:[#allocation2 + $0x1d8] sm:$0xff]
    %v98 = vld [vmem:[#allocation2 + $0x1e0] sm:$0xff]
    %v99 = vld [vmem:[#allocation2 + $0x1e8] sm:$0xff]
    %v100 = vld [vmem:[#allocation2 + $0x1f0] sm:$0xff]
    %v101 = vld [vmem:[#allocation2 + $0x1f8] sm:$0xff]
    %v102 = vld [vmem:[#allocation2 + $0x200] sm:$0xff]
    %v103 = vld [vmem:[#allocation2 + $0x208] sm:$0xff]
    %v104 = vld [vmem:[#allocation2 + $0x210] sm:$0xff]
    %v105 = vld [vmem:[#allocation2 + $0x218] sm:$0xff]
    %v106 = vld [vmem:[#allocation2 + $0x220] sm:$0xff]
    %v107 = vld [vmem:[#allocation2 + $0x228] sm:$0xff]
    %v108 = vld [vmem:[#allocation2 + $0x230] sm:$0xff]
    %v109 = vld [vmem:[#allocation2 + $0x238] sm:$0xff]
    %v110 = vld [vmem:[#allocation2 + $0x240] sm:$0xff]
    %v111 = vld [vmem:[#allocation2 + $0x248] sm:$0xff]
    %v112 = vld [vmem:[#allocation2 + $0x250] sm:$0xff]
    %v113 = vld [vmem:[#allocation2 + $0x258] sm:$0xff]
    %v114 = vld [vmem:[#allocation2 + $0x260] sm:$0xff]
    %v115 = vld [vmem:[#allocation2 + $0x268] sm:$0xff]
    %v116 = vld [vmem:[#allocation2 + $0x270] sm:$0xff]
    %v117 = vld [vmem:[#allocation2 + $0x278] sm:$0xff]
    %v118 = vld [vmem:[#allocation2 + $0x280] sm:$0xff]
    %v119 = vld [vmem:[#allocation2 + $0x288] sm:$0xff]
    %v120 = vld [vmem:[#allocation2 + $0x290] sm:$0xff]
    %v121 = vld [vmem:[#allocation2 + $0x298] sm:$0xff]
    %v122 = vld [vmem:[#allocation2 + $0x2a0] sm:$0xff]
    %v123 = vld [vmem:[#allocation2 + $0x2a8] sm:$0xff]
    %v124 = vld [vmem:[#allocation2 + $0x2b0] sm:$0xff]
    %v125 = vld [vmem:[#allocation2 + $0x2b8] sm:$0xff]
    %v126 = vld [vmem:[#allocation2 + $0x2c0] sm:$0xff]
    %v127 = vld [vmem:[#allocation2 + $0x2c8] sm:$0xff]
    %v128 = vld [vmem:[#allocation2 + $0x2d0] sm:$0xff]
    %v129 = vld [vmem:[#allocation2 + $0x2d8] sm:$0xff]
    %v130 = vld [vmem:[#allocation2 + $0x2e0] sm:$0xff]
    %v131 = vld [vmem:[#allocation2 + $0x2e8] sm:$0xff]
    %v132 = vld [vmem:[#allocation2 + $0x2f0] sm:$0xff]
    %v133 = vld [vmem:[#allocation2 + $0x2f8] sm:$0xff]
    %v134 = vld [vmem:[#allocation5] sm:$0x3f]
    %v136 = vlaneseq
    %v137 = vshrl.u32 %v136, 7
    %v138 = vsub.s32 0, %v137
    %v139 = vrot.slane %v134, %v138
    %v140 = vlaneseq
    %v141 = vshrl.u32 %v140, 7
    %v142 = vsub.s32 1, %v141
    %v143 = vrot.slane %v134, %v142
    %v144 = vlaneseq
    %v145 = vshrl.u32 %v144, 7
    %v146 = vsub.s32 2, %v145
    %v147 = vrot.slane %v134, %v146
    %v148 = vlaneseq
    %v149 = vshrl.u32 %v148, 7
    %v150 = vsub.s32 3, %v149
    %v151 = vrot.slane %v134, %v150
    %v152 = vlaneseq
    %v153 = vshrl.u32 %v152, 7
    %v154 = vsub.s32 4, %v153
    %v155 = vrot.slane %v134, %v154
    %v156 = vlaneseq
    %v157 = vshrl.u32 %v156, 7
    %v158 = vsub.s32 5, %v157
    %v159 = vrot.slane %v134, %v158
    %v166 = vmul.f32 %v38, %v139
    %v167 = vmul.f32 %v39, %v143
    %v168 = vmul.f32 %v40, %v147
    %v169 = vmul.f32 %v41, %v151
    %v170 = vmul.f32 %v42, %v155
    %v171 = vmul.f32 %v43, %v159
    %v172 = vmul.f32 %v44, %v139
    %v173 = vmul.f32 %v45, %v143
    %v174 = vmul.f32 %v46, %v147
    %v175 = vmul.f32 %v47, %v151
    %v176 = vmul.f32 %v48, %v155
    %v177 = vmul.f32 %v49, %v159
    %v178 = vmul.f32 %v50, %v139
    %v179 = vmul.f32 %v51, %v143
    %v180 = vmul.f32 %v52, %v147
    %v181 = vmul.f32 %v53, %v151
    %v182 = vmul.f32 %v54, %v155
    %v183 = vmul.f32 %v55, %v159
    %v184 = vmul.f32 %v56, %v139
    %v185 = vmul.f32 %v57, %v143
    %v186 = vmul.f32 %v58, %v147
    %v187 = vmul.f32 %v59, %v151
    %v188 = vmul.f32 %v60, %v155
    %v189 = vmul.f32 %v61, %v159
    %v190 = vmul.f32 %v62, %v139
    %v191 = vmul.f32 %v63, %v143
    %v192 = vmul.f32 %v64, %v147
    %v193 = vmul.f32 %v65, %v151
    %v194 = vmul.f32 %v66, %v155
    %v195 = vmul.f32 %v67, %v159
    %v196 = vmul.f32 %v68, %v139
    %v197 = vmul.f32 %v69, %v143
    %v198 = vmul.f32 %v70, %v147
    %v199 = vmul.f32 %v71, %v151
    %v200 = vmul.f32 %v72, %v155
    %v201 = vmul.f32 %v73, %v159
    %v202 = vmul.f32 %v74, %v139
    %v203 = vmul.f32 %v75, %v143
    %v204 = vmul.f32 %v76, %v147
    %v205 = vmul.f32 %v77, %v151
    %v206 = vmul.f32 %v78, %v155
    %v207 = vmul.f32 %v79, %v159
    %v208 = vmul.f32 %v80, %v139
    %v209 = vmul.f32 %v81, %v143
    %v210 = vmul.f32 %v82, %v147
    %v211 = vmul.f32 %v83, %v151
    %v212 = vmul.f32 %v84, %v155
    %v213 = vmul.f32 %v85, %v159
    %v214 = vmul.f32 %v86, %v139
    %v215 = vmul.f32 %v87, %v143
    %v216 = vmul.f32 %v88, %v147
    %v217 = vmul.f32 %v89, %v151
    %v218 = vmul.f32 %v90, %v155
    %v219 = vmul.f32 %v91, %v159
    %v220 = vmul.f32 %v92, %v139
    %v221 = vmul.f32 %v93, %v143
    %v222 = vmul.f32 %v94, %v147
    %v223 = vmul.f32 %v95, %v151
    %v224 = vmul.f32 %v96, %v155
    %v225 = vmul.f32 %v97, %v159
    %v226 = vmul.f32 %v98, %v139
    %v227 = vmul.f32 %v99, %v143
    %v228 = vmul.f32 %v100, %v147
    %v229 = vmul.f32 %v101, %v151
    %v230 = vmul.f32 %v102, %v155
    %v231 = vmul.f32 %v103, %v159
    %v232 = vmul.f32 %v104, %v139
    %v233 = vmul.f32 %v105, %v143
    %v234 = vmul.f32 %v106, %v147
    %v235 = vmul.f32 %v107, %v151
    %v236 = vmul.f32 %v108, %v155
    %v237 = vmul.f32 %v109, %v159
    %v238 = vmul.f32 %v110, %v139
    %v239 = vmul.f32 %v111, %v143
    %v240 = vmul.f32 %v112, %v147
    %v241 = vmul.f32 %v113, %v151
    %v242 = vmul.f32 %v114, %v155
    %v243 = vmul.f32 %v115, %v159
    %v244 = vmul.f32 %v116, %v139
    %v245 = vmul.f32 %v117, %v143
    %v246 = vmul.f32 %v118, %v147
    %v247 = vmul.f32 %v119, %v151
    %v248 = vmul.f32 %v120, %v155
    %v249 = vmul.f32 %v121, %v159
    %v250 = vmul.f32 %v122, %v139
    %v251 = vmul.f32 %v123, %v143
    %v252 = vmul.f32 %v124, %v147
    %v253 = vmul.f32 %v125, %v151
    %v254 = vmul.f32 %v126, %v155
    %v255 = vmul.f32 %v127, %v159
    %v256 = vmul.f32 %v128, %v139
    %v257 = vmul.f32 %v129, %v143
    %v258 = vmul.f32 %v130, %v147
    %v259 = vmul.f32 %v131, %v151
    %v260 = vmul.f32 %v132, %v155
    %v261 = vmul.f32 %v133, %v159
    %262 = vst [vmem:[#allocation7] sm:$0xff] %v166
    %263 = vst [vmem:[#allocation7 + $0x8] sm:$0xff] %v167
    %264 = vst [vmem:[#allocation7 + $0x10] sm:$0xff] %v168
    %265 = vst [vmem:[#allocation7 + $0x18] sm:$0xff] %v169
    %266 = vst [vmem:[#allocation7 + $0x20] sm:$0xff] %v170
    %267 = vst [vmem:[#allocation7 + $0x28] sm:$0xff] %v171
    %268 = vst [vmem:[#allocation7 + $0x30] sm:$0xff] %v172
    %269 = vst [vmem:[#allocation7 + $0x38] sm:$0xff] %v173
    %270 = vst [vmem:[#allocation7 + $0x40] sm:$0xff] %v174
    %271 = vst [vmem:[#allocation7 + $0x48] sm:$0xff] %v175
    %272 = vst [vmem:[#allocation7 + $0x50] sm:$0xff] %v176
    %273 = vst [vmem:[#allocation7 + $0x58] sm:$0xff] %v177
    %274 = vst [vmem:[#allocation7 + $0x60] sm:$0xff] %v178
    %275 = vst [vmem:[#allocation7 + $0x68] sm:$0xff] %v179
    %276 = vst [vmem:[#allocation7 + $0x70] sm:$0xff] %v180
    %277 = vst [vmem:[#allocation7 + $0x78] sm:$0xff] %v181
    %278 = vst [vmem:[#allocation7 + $0x80] sm:$0xff] %v182
    %279 = vst [vmem:[#allocation7 + $0x88] sm:$0xff] %v183
    %280 = vst [vmem:[#allocation7 + $0x90] sm:$0xff] %v184
    %281 = vst [vmem:[#allocation7 + $0x98] sm:$0xff] %v185
    %282 = vst [vmem:[#allocation7 + $0xa0] sm:$0xff] %v186
    %283 = vst [vmem:[#allocation7 + $0xa8] sm:$0xff] %v187
    %284 = vst [vmem:[#allocation7 + $0xb0] sm:$0xff] %v188
    %285 = vst [vmem:[#allocation7 + $0xb8] sm:$0xff] %v189
    %286 = vst [vmem:[#allocation7 + $0xc0] sm:$0xff] %v190
    %287 = vst [vmem:[#allocation7 + $0xc8] sm:$0xff] %v191
    %288 = vst [vmem:[#allocation7 + $0xd0] sm:$0xff] %v192
    %289 = vst [vmem:[#allocation7 + $0xd8] sm:$0xff] %v193
    %290 = vst [vmem:[#allocation7 + $0xe0] sm:$0xff] %v194
    %291 = vst [vmem:[#allocation7 + $0xe8] sm:$0xff] %v195
    %292 = vst [vmem:[#allocation7 + $0xf0] sm:$0xff] %v196
    %293 = vst [vmem:[#allocation7 + $0xf8] sm:$0xff] %v197
    %294 = vst [vmem:[#allocation7 + $0x100] sm:$0xff] %v198
    %295 = vst [vmem:[#allocation7 + $0x108] sm:$0xff] %v199
    %296 = vst [vmem:[#allocation7 + $0x110] sm:$0xff] %v200
    %297 = vst [vmem:[#allocation7 + $0x118] sm:$0xff] %v201
    %298 = vst [vmem:[#allocation7 + $0x120] sm:$0xff] %v202
    %299 = vst [vmem:[#allocation7 + $0x128] sm:$0xff] %v203
    %300 = vst [vmem:[#allocation7 + $0x130] sm:$0xff] %v204
    %301 = vst [vmem:[#allocation7 + $0x138] sm:$0xff] %v205
    %302 = vst [vmem:[#allocation7 + $0x140] sm:$0xff] %v206
    %303 = vst [vmem:[#allocation7 + $0x148] sm:$0xff] %v207
    %304 = vst [vmem:[#allocation7 + $0x150] sm:$0xff] %v208
    %305 = vst [vmem:[#allocation7 + $0x158] sm:$0xff] %v209
    %306 = vst [vmem:[#allocation7 + $0x160] sm:$0xff] %v210
    %307 = vst [vmem:[#allocation7 + $0x168] sm:$0xff] %v211
    %308 = vst [vmem:[#allocation7 + $0x170] sm:$0xff] %v212
    %309 = vst [vmem:[#allocation7 + $0x178] sm:$0xff] %v213
    %310 = vst [vmem:[#allocation7 + $0x180] sm:$0xff] %v214
    %311 = vst [vmem:[#allocation7 + $0x188] sm:$0xff] %v215
    %312 = vst [vmem:[#allocation7 + $0x190] sm:$0xff] %v216
    %313 = vst [vmem:[#allocation7 + $0x198] sm:$0xff] %v217
    %314 = vst [vmem:[#allocation7 + $0x1a0] sm:$0xff] %v218
    %315 = vst [vmem:[#allocation7 + $0x1a8] sm:$0xff] %v219
    %316 = vst [vmem:[#allocation7 + $0x1b0] sm:$0xff] %v220
    %317 = vst [vmem:[#allocation7 + $0x1b8] sm:$0xff] %v221
    %318 = vst [vmem:[#allocation7 + $0x1c0] sm:$0xff] %v222
    %319 = vst [vmem:[#allocation7 + $0x1c8] sm:$0xff] %v223
    %320 = vst [vmem:[#allocation7 + $0x1d0] sm:$0xff] %v224
    %321 = vst [vmem:[#allocation7 + $0x1d8] sm:$0xff] %v225
    %322 = vst [vmem:[#allocation7 + $0x1e0] sm:$0xff] %v226
    %323 = vst [vmem:[#allocation7 + $0x1e8] sm:$0xff] %v227
    %324 = vst [vmem:[#allocation7 + $0x1f0] sm:$0xff] %v228
    %325 = vst [vmem:[#allocation7 + $0x1f8] sm:$0xff] %v229
    %326 = vst [vmem:[#allocation7 + $0x200] sm:$0xff] %v230
    %327 = vst [vmem:[#allocation7 + $0x208] sm:$0xff] %v231
    %328 = vst [vmem:[#allocation7 + $0x210] sm:$0xff] %v232
    %329 = vst [vmem:[#allocation7 + $0x218] sm:$0xff] %v233
    %330 = vst [vmem:[#allocation7 + $0x220] sm:$0xff] %v234
    %331 = vst [vmem:[#allocation7 + $0x228] sm:$0xff] %v235
    %332 = vst [vmem:[#allocation7 + $0x230] sm:$0xff] %v236
    %333 = vst [vmem:[#allocation7 + $0x238] sm:$0xff] %v237
    %334 = vst [vmem:[#allocation7 + $0x240] sm:$0xff] %v238
    %335 = vst [vmem:[#allocation7 + $0x248] sm:$0xff] %v239
    %336 = vst [vmem:[#allocation7 + $0x250] sm:$0xff] %v240
    %337 = vst [vmem:[#allocation7 + $0x258] sm:$0xff] %v241
    %338 = vst [vmem:[#allocation7 + $0x260] sm:$0xff] %v242
    %339 = vst [vmem:[#allocation7 + $0x268] sm:$0xff] %v243
    %340 = vst [vmem:[#allocation7 + $0x270] sm:$0xff] %v244
    %341 = vst [vmem:[#allocation7 + $0x278] sm:$0xff] %v245
    %342 = vst [vmem:[#allocation7 + $0x280] sm:$0xff] %v246
    %343 = vst [vmem:[#allocation7 + $0x288] sm:$0xff] %v247
    %344 = vst [vmem:[#allocation7 + $0x290] sm:$0xff] %v248
    %345 = vst [vmem:[#allocation7 + $0x298] sm:$0xff] %v249
    %346 = vst [vmem:[#allocation7 + $0x2a0] sm:$0xff] %v250
    %347 = vst [vmem:[#allocation7 + $0x2a8] sm:$0xff] %v251
    %348 = vst [vmem:[#allocation7 + $0x2b0] sm:$0xff] %v252
    %349 = vst [vmem:[#allocation7 + $0x2b8] sm:$0xff] %v253
    %350 = vst [vmem:[#allocation7 + $0x2c0] sm:$0xff] %v254
    %351 = vst [vmem:[#allocation7 + $0x2c8] sm:$0xff] %v255
    %352 = vst [vmem:[#allocation7 + $0x2d0] sm:$0xff] %v256
    %353 = vst [vmem:[#allocation7 + $0x2d8] sm:$0xff] %v257
    %354 = vst [vmem:[#allocation7 + $0x2e0] sm:$0xff] %v258
    %355 = vst [vmem:[#allocation7 + $0x2e8] sm:$0xff] %v259
    %356 = vst [vmem:[#allocation7 + $0x2f0] sm:$0xff] %v260
    %357 = vst [vmem:[#allocation7 + $0x2f8] sm:$0xff] %v261
    // Predicated region
    $region18: #{tpu_custom_call.1} parent=1 // pred_check
      _
    $region19: #{tpu_custom_call.1} parent=1 // pred_check_branch
      %359 = sbr.rel (0) target = $region21
    $region20: #{tpu_custom_call.1} parent=1 // pred_region
      %s361 = ssub.s32 12288, 12288
      %362 = vsyncadd [#allocation4], %s361
      %s363 = sshll.u32 [#allocation7], 4
      %s364 = int_to_ptr.vmem [resolvable:$true] %s363
      %369 = dma.vmem_to_hbm [thread:$0]  %s364, 12288, %s2, [#allocation4], 768, 768, 48
    $region21: #{tpu_custom_call.1} parent=1 // pred_fallthru
      _
    // Predicated region
    $region22: #{tpu_custom_call.1} parent=1 // pred_check
      _
    $region23: #{tpu_custom_call.1} parent=1 // pred_check_branch
      %371 = sbr.rel (0) target = $region25
    $region24: #{tpu_custom_call.1} parent=1 // pred_region
      %372 = dma.done [#allocation4], 12288
    $region25: #{tpu_custom_call.1} parent=1 // pred_fallthru
      _
    %373 = vsyncpa [#allocation3], 1
    %374 = vsyncpa [#allocation6], 1
    %375 = vsyncpa [#allocation4], 1

</llo_original>
